<compile_context>
chip_gen: v6e
topology: v6e:2x2x1
jax: 0.10.0
libtpu: 0.0.40
codegen_flags: <defaults>
</compile_context>

<pallas_src>
import functools

import jax
import jax.numpy as jnp
from jax.experimental import pallas as pl
from jax.experimental.pallas import tpu as pltpu


# --------------------------------------------------------------------------- #
# Kernels
# --------------------------------------------------------------------------- #
def _ffn_kernel_accout(x_ref, w1_ref, b1_ref, w2_ref, b2_ref, o_ref):
    """f32 output: accumulate the d_ff-sliced fc2 directly into o_ref.

    o_ref's block index is (i, 0) -> constant over the k (d_ff) grid axis, so
    the output tile stays VMEM-resident across the reduction; no scratch
    accumulator and no finalize copy are needed.
    """
    k = pl.program_id(1)
    # fc1 partial: (tm, d_model) @ (d_model, tk) with f32 accumulation (MXU).
    h = jnp.dot(x_ref[...], w1_ref[...], preferred_element_type=jnp.float32)
    # bias + ReLU in f32; dropout(p=0.1) in eval mode == identity.
    h = jnp.maximum(h + b1_ref[...].astype(jnp.float32), 0.0)
    # partial fc2 contribution of this d_ff slice
    contrib = jnp.dot(h.astype(w2_ref.dtype), w2_ref[...],
                      preferred_element_type=jnp.float32)

    @pl.when(k == 0)
    def _():
        o_ref[...] = contrib + b2_ref[...].astype(jnp.float32)

    @pl.when(k > 0)
    def _():
        o_ref[...] += contrib


def _ffn_kernel_scratch(x_ref, w1_ref, b1_ref, w2_ref, b2_ref, o_ref, acc_ref):
    """Non-f32 output: accumulate in f32 VMEM scratch, cast once at the end."""
    k = pl.program_id(1)

    @pl.when(k == 0)
    def _():
        acc_ref[...] = jnp.zeros_like(acc_ref)

    h = jnp.dot(x_ref[...], w1_ref[...], preferred_element_type=jnp.float32)
    h = jnp.maximum(h + b1_ref[...].astype(jnp.float32), 0.0)
    acc_ref[...] += jnp.dot(h.astype(w2_ref.dtype), w2_ref[...],
                            preferred_element_type=jnp.float32)

    @pl.when(k == pl.num_programs(1) - 1)
    def _():
        o_ref[...] = (acc_ref[...] +
                      b2_ref[...].astype(jnp.float32)).astype(o_ref.dtype)


# --------------------------------------------------------------------------- #
# Tile selection helpers (all plain-Python, evaluated at trace time)
# --------------------------------------------------------------------------- #
def _round_up(x, m):
    return (x + m - 1) // m * m


def _sublane_multiple(dtype):
    """Rows per packed sublane group: 8 for 4B dtypes, 16 for 2B, 32 for 1B."""
    return max(8, 32 // jnp.dtype(dtype).itemsize)


def _vmem_capacity_bytes():
    try:
        return int(pltpu.get_tpu_info().vmem_capacity_bytes)
    except Exception:
        return 64 * 1024 * 1024  # conservative (v7x per-TensorCore)


def _vmem_need(tm, tk, d_model, in_bytes, w_bytes, out_bytes, use_scratch):
    """Conservative VMEM estimate (double-buffered tiles + intermediates)."""
    need = 2 * tm * d_model * in_bytes          # x tiles
    need += 2 * tm * d_model * out_bytes        # out tiles
    need += 2 * d_model * tk * w_bytes          # w1 tiles
    need += 2 * tk * d_model * w_bytes          # w2 tiles
    need += 2 * (tk + d_model) * 4              # bias tiles (f32 upper bound)
    need += tm * tk * 4                         # fc1 intermediate h (f32)
    if w_bytes < 4:
        need += tm * tk * w_bytes               # cast copy of h before fc2
    if use_scratch:
        need += tm * d_model * 4                # f32 accumulator scratch
    return need


def _tm_candidates(n_tokens, sub, tm_max):
    tm_max = max(sub, _round_up(tm_max, sub))
    if n_tokens >= tm_max:
        base = tm_max
    else:
        base = _round_up(max(n_tokens, 1), sub)
        if base > 128:                      # avoid ragged MXU feeds (e.g. 136)
            base = _round_up(base, 128)
        base = min(base, tm_max)
    cands = []
    t = base
    while True:
        cands.append(t)
        if t <= sub:
            break
        nxt = max(sub, (t // 2) // sub * sub)
        if nxt >= t:
            break
        t = nxt
    return cands


def _select_tiles(n_tokens, d_model, d_ff, in_bytes, w_bytes, out_bytes,
                  use_scratch, budget, sub, tm_max, tk_forced):
    tm_cands = _tm_candidates(n_tokens, sub, tm_max)

    def fits(tm, tk):
        return _vmem_need(tm, tk, d_model, in_bytes, w_bytes,
                          out_bytes, use_scratch) <= budget

    if tk_forced is not None:
        for tm in tm_cands:
            if fits(tm, tk_forced):
                return tm, tk_forced
        return tm_cands[-1], tk_forced

    # Phase 1: weights fully VMEM-resident (DMA'd once for the whole kernel).
    for tm in tm_cands:
        if fits(tm, d_ff):
            return tm, d_ff

    # Phase 2: stream d_ff in 128-multiple slices; biggest token tile first.
    tk_cands = [t for t in (512, 256, 128) if t < d_ff] or [d_ff]
    for tm in tm_cands:
        for tk in tk_cands:
            if fits(tm, tk):
                return tm, tk
    return tm_cands[-1], tk_cands[-1]


# --------------------------------------------------------------------------- #
# Wrapper
# --------------------------------------------------------------------------- #
@functools.partial(jax.jit,
                   static_argnames=("block_m", "block_ff", "compute_dtype"))
def position_wise_feed_forward(x, w1, b1, w2, b2, *,
                               block_m=None, block_ff=None, compute_dtype=None):
    """x: (..., d_model) -> (..., d_model). Fused FFN on TPU via Pallas."""
    orig_shape = x.shape
    out_dtype = x.dtype
    d_model = orig_shape[-1]
    d_ff = w1.shape[1]

    if compute_dtype is not None:           # optional bf16 streaming
        x = x.astype(compute_dtype)
        w1 = w1.astype(compute_dtype)
        w2 = w2.astype(compute_dtype)

    x2d = x.reshape(-1, d_model)
    n_tokens = x2d.shape[0]

    in_bytes = jnp.dtype(x2d.dtype).itemsize
    w_bytes = jnp.dtype(w1.dtype).itemsize
    out_bytes = jnp.dtype(out_dtype).itemsize
    use_scratch = jnp.dtype(out_dtype) != jnp.dtype(jnp.float32)

    sub = _sublane_multiple(x2d.dtype)
    cap = _vmem_capacity_bytes()
    budget = max(16 << 20, min(int(cap * 0.70), cap - (12 << 20)))

    tm_max = 1024 if block_m is None else block_m
    tm, tk = _select_tiles(n_tokens, d_model, d_ff, in_bytes, w_bytes,
                           out_bytes, use_scratch, budget, sub, tm_max,
                           block_ff)

    # Token padding; keep >= 2 token blocks when possible (v7x megacore).
    n_pad = _round_up(max(n_tokens, 1), tm)
    if n_pad // tm < 2 and tm > sub:
        half = max(sub, (tm // 2) // sub * sub)
        if half < tm and _round_up(max(n_tokens, 1), half) // half >= 2:
            tm = half
            n_pad = _round_up(max(n_tokens, 1), tm)
    if n_pad != n_tokens:
        x2d = jnp.pad(x2d, ((0, n_pad - n_tokens), (0, 0)))

    # d_ff padding so the streamed tile divides the hidden dim exactly.
    d_ff_pad = _round_up(d_ff, tk)
    if d_ff_pad != d_ff:
        w1 = jnp.pad(w1, ((0, 0), (0, d_ff_pad - d_ff)))
        b1 = jnp.pad(b1, ((0, d_ff_pad - d_ff),))
        w2 = jnp.pad(w2, ((0, d_ff_pad - d_ff), (0, 0)))

    b1_2d = b1.reshape(1, d_ff_pad)
    b2_2d = b2.reshape(1, d_model)

    grid = (n_pad // tm, d_ff_pad // tk)
    nk = grid[1]

    est = _vmem_need(tm, tk, d_model, in_bytes, w_bytes, out_bytes, use_scratch)
    vmem_limit = int(min(cap - (4 << 20), max(2 * est, 32 << 20)))

    # Advisory cost estimate so XLA schedules neighbors sensibly.
    flops = 4 * n_pad * d_model * d_ff_pad
    weight_passes = grid[0] if nk > 1 else 1       # resident -> fetched once
    bytes_accessed = (
        n_pad * d_model * (in_bytes + out_bytes)
        + 2 * d_model * d_ff_pad * w_bytes * weight_passes
        + (d_ff_pad + d_model) * jnp.dtype(b1.dtype).itemsize)

    kernel = _ffn_kernel_scratch if use_scratch else _ffn_kernel_accout
    scratch_shapes = ([pltpu.VMEM((tm, d_model), jnp.float32)]
                      if use_scratch else [])

    out2d = pl.pallas_call(
        kernel,
        out_shape=jax.ShapeDtypeStruct((n_pad, d_model), out_dtype),
        grid_spec=pltpu.PrefetchScalarGridSpec(
            num_scalar_prefetch=0,
            grid=grid,
            in_specs=[
                pl.BlockSpec((tm, d_model), lambda i, k: (i, 0)),   # x tile
                pl.BlockSpec((d_model, tk), lambda i, k: (0, k)),   # w1 slice
                pl.BlockSpec((1, tk), lambda i, k: (0, k)),         # b1 slice
                pl.BlockSpec((tk, d_model), lambda i, k: (k, 0)),   # w2 slice
                pl.BlockSpec((1, d_model), lambda i, k: (0, 0)),    # b2
            ],
            out_specs=pl.BlockSpec((tm, d_model), lambda i, k: (i, 0)),
            scratch_shapes=scratch_shapes,
        ),
        compiler_params=pltpu.CompilerParams(
            dimension_semantics=("parallel", "arbitrary"),
            vmem_limit_bytes=vmem_limit,
        ),
        cost_estimate=pl.CostEstimate(
            flops=int(flops), transcendentals=0,
            bytes_accessed=int(bytes_accessed)),
    )(x2d, w1, b1_2d, w2, b2_2d)

    return out2d[:n_tokens].reshape(orig_shape)


# --------------------------------------------------------------------------- #
# Reference + tests
# --------------------------------------------------------------------------- #
def _reference(x, w1, b1, w2, b2):
    hp = jax.lax.Precision.HIGHEST
    h = jnp.maximum(jnp.dot(x, w1, precision=hp) + b1, 0.0)
    return jnp.dot(h, w2, precision=hp) + b2


if __name__ == "__main__":
    # Shapes consistent with the module: batch=2, seq=8, d_model=32, d_ff=64
    batch, seq, d_model, d_ff = 2, 8, 32, 64

    key = jax.random.PRNGKey(0)
    kx, kw1, kb1, kw2, kb2 = jax.random.split(key, 5)

    x = jax.random.normal(kx, (batch, seq, d_model), dtype=jnp.float32)
    w1 = jax.random.uniform(kw1, (d_model, d_ff), jnp.float32,
                            -1.0 / d_model ** 0.5, 1.0 / d_model ** 0.5)
    b1 = jax.random.uniform(kb1, (d_ff,), jnp.float32,
                            -1.0 / d_model ** 0.5, 1.0 / d_model ** 0.5)
    w2 = jax.random.uniform(kw2, (d_ff, d_model), jnp.float32,
                            -1.0 / d_ff ** 0.5, 1.0 / d_ff ** 0.5)
    b2 = jax.random.uniform(kb2, (d_model,), jnp.float32,
                            -1.0 / d_ff ** 0.5, 1.0 / d_ff ** 0.5)

    out = jax.block_until_ready(position_wise_feed_forward(x, w1, b1, w2, b2))
    ref = _reference(x, w1, b1, w2, b2)
    assert out.shape == x.shape, (out.shape, x.shape)
    assert jnp.allclose(out, ref, atol=2e-4, rtol=2e-4), "mismatch (resident)"

    # Ragged token count (padding path).
    x3 = jax.random.normal(kx, (3, 5, d_model), dtype=jnp.float32)
    out3 = jax.block_until_ready(position_wise_feed_forward(x3, w1, b1, w2, b2))
    assert jnp.allclose(out3, _reference(x3, w1, b1, w2, b2),
                        atol=2e-4, rtol=2e-4), "mismatch (ragged)"

    # Forced d_ff streaming (multi-k reduction, f32 accumulate-into-output).
    dm2, dff2 = 128, 256
    kx2, kw3, kb3, kw4, kb4 = jax.random.split(jax.random.PRNGKey(1), 5)
    x2 = jax.random.normal(kx2, (4, 32, dm2), dtype=jnp.float32)
    w1b = jax.random.uniform(kw3, (dm2, dff2), jnp.float32, -0.05, 0.05)
    b1b = jax.random.uniform(kb3, (dff2,), jnp.float32, -0.05, 0.05)
    w2b = jax.random.uniform(kw4, (dff2, dm2), jnp.float32, -0.05, 0.05)
    b2b = jax.random.uniform(kb4, (dm2,), jnp.float32, -0.05, 0.05)
    out2 = jax.block_until_ready(
        position_wise_feed_forward(x2, w1b, b1b, w2b, b2b,
                                   block_m=64, block_ff=128))
    assert jnp.allclose(out2, _reference(x2, w1b, b1b, w2b, b2b),
                        atol=2e-4, rtol=2e-4), "mismatch (streamed f32)"

    # bf16 end-to-end (non-f32 output -> f32 scratch accumulator), streamed.
    xb, w1c, b1c, w2c, b2c = (a.astype(jnp.bfloat16)
                              for a in (x2, w1b, b1b, w2b, b2b))
    outb = jax.block_until_ready(
        position_wise_feed_forward(xb, w1c, b1c, w2c, b2c,
                                   block_m=64, block_ff=128))
    refb = _reference(xb.astype(jnp.float32), w1c.astype(jnp.float32),
                      b1c.astype(jnp.float32), w2c.astype(jnp.float32),
                      b2c.astype(jnp.float32))
    assert outb.dtype == jnp.bfloat16
    assert jnp.allclose(outb.astype(jnp.float32), refb,
                        atol=3e-2, rtol=3e-2), "mismatch (streamed bf16)"

    print("KERNEL_OK")
</pallas_src>

<mosaic_0001>
module attributes {stable_mosaic.version = 11 : i64} {
  func.func @_ffn_kernel_accout(%arg0: i32, %arg1: i32, %arg2: memref<8x32xf32, #tpu.memory_space<vmem>>, %arg3: memref<32x64xf32, #tpu.memory_space<vmem>>, %arg4: memref<1x64xf32, #tpu.memory_space<vmem>>, %arg5: memref<64x32xf32, #tpu.memory_space<vmem>>, %arg6: memref<1x32xf32, #tpu.memory_space<vmem>>, %arg7: memref<8x32xf32, #tpu.memory_space<vmem>>) attributes {dimension_semantics = [#tpu.dimension_semantics<parallel>, #tpu.dimension_semantics<arbitrary>], iteration_bounds = array<i64: 2, 1>, scalar_prefetch = 0 : i64, scratch_operands = 0 : i64, tpu.core_type = #tpu.core_type<tc>, window_params = [{transform_indices = @transform_0, window_bounds = array<i64: 8, 32>}, {transform_indices = @transform_1, window_bounds = array<i64: 32, 64>}, {transform_indices = @transform_2, window_bounds = array<i64: 1, 64>}, {transform_indices = @transform_3, window_bounds = array<i64: 64, 32>}, {pipeline_mode = #tpu.pipeline_mode<synchronous>, transform_indices = @transform_4, window_bounds = array<i64: 1, 32>}, {transform_indices = @transform_5, window_bounds = array<i64: 8, 32>}]} {
    %c0 = arith.constant 0 : index
    %c0_0 = arith.constant 0 : index
    %0 = vector.load %arg2[%c0, %c0_0] : memref<8x32xf32, #tpu.memory_space<vmem>>, vector<8x32xf32>
    %c0_1 = arith.constant 0 : index
    %c0_2 = arith.constant 0 : index
    %1 = vector.load %arg3[%c0_1, %c0_2] : memref<32x64xf32, #tpu.memory_space<vmem>>, vector<32x64xf32>
    %cst = arith.constant dense<0.000000e+00> : vector<8x64xf32>
    %2 = tpu.matmul %0, %1, %cst {dimension_numbers = #tpu.dot_dimension_numbers<[1], [0], [0], [1], [0, 0, 1, 1], [], []>} : vector<8x32xf32>, vector<32x64xf32>, vector<8x64xf32> -> vector<8x64xf32>
    %c0_3 = arith.constant 0 : index
    %c0_4 = arith.constant 0 : index
    %3 = vector.load %arg4[%c0_3, %c0_4] : memref<1x64xf32, #tpu.memory_space<vmem>>, vector<1x64xf32>
    %4 = vector.broadcast %3 : vector<1x64xf32> to vector<8x64xf32>
    %5 = arith.addf %2, %4 : vector<8x64xf32>
    %cst_5 = arith.constant 0.000000e+00 : f32
    %6 = vector.broadcast %cst_5 : f32 to vector<8x64xf32>
    %7 = arith.maximumf %5, %6 : vector<8x64xf32>
    %c0_6 = arith.constant 0 : index
    %c0_7 = arith.constant 0 : index
    %8 = vector.load %arg5[%c0_6, %c0_7] : memref<64x32xf32, #tpu.memory_space<vmem>>, vector<64x32xf32>
    %cst_8 = arith.constant dense<0.000000e+00> : vector<8x32xf32>
    %9 = tpu.matmul %7, %8, %cst_8 {dimension_numbers = #tpu.dot_dimension_numbers<[1], [0], [0], [1], [0, 0, 1, 1], [], []>} : vector<8x64xf32>, vector<64x32xf32>, vector<8x32xf32> -> vector<8x32xf32>
    %c0_i32 = arith.constant 0 : i32
    %10 = arith.cmpi eq, %arg1, %c0_i32 : i32
    %11 = arith.extui %10 : i1 to i32
    %c0_i32_9 = arith.constant 0 : i32
    %12 = arith.cmpi ne, %11, %c0_i32_9 : i32
    scf.if %12 {
      %c0_12 = arith.constant 0 : index
      %c0_13 = arith.constant 0 : index
      %16 = vector.load %arg6[%c0_12, %c0_13] : memref<1x32xf32, #tpu.memory_space<vmem>>, vector<1x32xf32>
      %17 = vector.broadcast %16 : vector<1x32xf32> to vector<8x32xf32>
      %18 = arith.addf %9, %17 : vector<8x32xf32>
      %c0_14 = arith.constant 0 : index
      %c0_15 = arith.constant 0 : index
      %19 = vector.load %arg7[%c0_14, %c0_15] : memref<8x32xf32, #tpu.memory_space<vmem>>, vector<8x32xf32>
      tpu.vector_store %arg7[%c0_14, %c0_15], %18 {strides = array<i32>} : memref<8x32xf32, #tpu.memory_space<vmem>>, vector<8x32xf32>,
    } else {
    }
    %c0_i32_10 = arith.constant 0 : i32
    %13 = arith.cmpi sgt, %arg1, %c0_i32_10 : i32
    %14 = arith.extui %13 : i1 to i32
    %c0_i32_11 = arith.constant 0 : i32
    %15 = arith.cmpi ne, %14, %c0_i32_11 : i32
    scf.if %15 {
      %c0_12 = arith.constant 0 : index
      %c0_13 = arith.constant 0 : index
      %16 = vector.load %arg7[%c0_12, %c0_13] : memref<8x32xf32, #tpu.memory_space<vmem>>, vector<8x32xf32>
      %17 = arith.addf %16, %9 : vector<8x32xf32>
      %c0_14 = arith.constant 0 : index
      %c0_15 = arith.constant 0 : index
      %18 = vector.load %arg7[%c0_14, %c0_15] : memref<8x32xf32, #tpu.memory_space<vmem>>, vector<8x32xf32>
      tpu.vector_store %arg7[%c0_14, %c0_15], %17 {strides = array<i32>} : memref<8x32xf32, #tpu.memory_space<vmem>>, vector<8x32xf32>,
    } else {
    }
    return
  }
  func.func @transform_0(%arg0: i32, %arg1: i32) -> (i32, i32) {
    %c0_i32 = arith.constant 0 : i32
    %c0_i32_0 = arith.constant 0 : i32
    return %arg0, %c0_i32 : i32, i32
  }
  func.func @transform_1(%arg0: i32, %arg1: i32) -> (i32, i32) {
    %c0_i32 = arith.constant 0 : i32
    %c0_i32_0 = arith.constant 0 : i32
    return %c0_i32, %arg1 : i32, i32
  }
  func.func @transform_2(%arg0: i32, %arg1: i32) -> (i32, i32) {
    %c0_i32 = arith.constant 0 : i32
    %c0_i32_0 = arith.constant 0 : i32
    return %c0_i32, %arg1 : i32, i32
  }
  func.func @transform_3(%arg0: i32, %arg1: i32) -> (i32, i32) {
    %c0_i32 = arith.constant 0 : i32
    %c0_i32_0 = arith.constant 0 : i32
    return %arg1, %c0_i32 : i32, i32
  }
  func.func @transform_4(%arg0: i32, %arg1: i32) -> (i32, i32) {
    %c0_i32 = arith.constant 0 : i32
    %c0_i32_0 = arith.constant 0 : i32
    %c0_i32_1 = arith.constant 0 : i32
    return %c0_i32, %c0_i32_0 : i32, i32
  }
  func.func @transform_5(%arg0: i32, %arg1: i32) -> (i32, i32) {
    %c0_i32 = arith.constant 0 : i32
    %c0_i32_0 = arith.constant 0 : i32
    return %arg0, %c0_i32 : i32, i32
  }
}

</mosaic_0001>

<llo_original>
// kernel: position_wise_feed_forward.1
$region0: #{position_wise_feed_forward.1}
  #allocation0 [shape = 'u32[]', space=smem, size = 0x4, offset = 0x4, fixed_abs, tag = 'smem constant byte address 0x4 - core index']
  #allocation1 [shape = 'u32[144,128]{1,0:T(1,128)}', space=vmem, size = 0x12000, scoped, tag = 'internal scratch']
  %s0 = inlined_call_operand.vmem [shape: f32[16,32], index: 0, kind: input, shape index: {}]
  %s1 = inlined_call_operand.vmem [shape: f32[32,64], index: 1, kind: input, shape index: {}]
  %s2 = inlined_call_operand.vmem [shape: f32[1,64], index: 2, kind: input, shape index: {}]
  %s3 = inlined_call_operand.vmem [shape: f32[64,32], index: 3, kind: input, shape index: {}]
  %s4 = inlined_call_operand.vmem [shape: f32[1,32], index: 4, kind: input, shape index: {}]
  %s5 = inlined_call_operand.hbm [shape: f32[16,32], index: 5, kind: output, shape index: {}]
  %s6 = sld [smem:[#allocation0]]
  $region61: #{position_wise_feed_forward.1} parent=0
    _
  %s8 = ssub.s32 1, %s6
  %s9 = scalar_select 0, %s8, %s6
  $region1: #{position_wise_feed_forward.1} parent=0
    #allocation2 [shape = 'u8[8192]{0}', space=vmem, size = 0x2000, scoped, tag = 'output window, operand 0']
    #allocation3 [shape = 's32[2]{0}', space=sflag, size = 0x8, scoped, tag = 'scoped memory for position_wise_feed_forward.1']
    %10 = vsyncpa [#allocation3], 0
    %s11 = scalar_lea.sflag [#allocation3], 1
    %12 = vsyncpa %s11, 0
    loop: start=0, step=1, limit=4
    $region2: #{position_wise_feed_forward.1} parent=1 // loop_pre_header
      _
    $region3: #{position_wise_feed_forward.1} parent=1 // loop_header
      %s14 = sphi 0, %s18
      %p15 = scmp.ge.s32.totalorder %s14, 4
      %s21 = sphi 0, %s33
      %s22 = sphi 0, %s29
      %s23 = sphi 0, %s21
      %s24 = sphi 0, %s22
      %s25 = sphi 0, %s23
      %s26 = sphi 0, %s24
      %s36 = sphi 0, %s38
      %s39 = sphi 0, %s36
      %s40 = sphi 0, %s39
      %s56 = sphi 0, %s40
      %s62 = sphi 0, %s64
      %s65 = sphi 0, %s62
      %s66 = sphi 0, %s65
      %s82 = sphi 0, %s66
      %s88 = sphi 0, %s90
      %s91 = sphi 0, %s88
      %s92 = sphi 0, %s91
      %s108 = sphi 0, %s92
      %s114 = sphi 0, %s116
      %s117 = sphi 0, %s114
      %s118 = sphi 0, %s117
      %s134 = sphi 0, %s118
      %s138 = sphi 0, %s138
      %s140 = sphi 0, %s138
      %s141 = sphi 0, %s140
      %s155 = sphi 0, %s141
      %s161 = sphi 0, %s163
      %s164 = sphi 0, %s161
      %s165 = sphi 0, %s164
      %s181 = sphi 0, %s165
    $region4: #{position_wise_feed_forward.1} parent=1 // loop_header_branch
      %17 = sbr.rel (%p15) target = $region8
    $region5: #{position_wise_feed_forward.1} parent=1 // loop_body
      %s19 = ssub.s32 %s14, 1
      %s20 = ssub.s32 %s14, 2
      %s27 = sadd.s32 1, %s22
      %p28 = scmp.ge.s32.totalorder %s27, 1
      %s29 = scalar_select %p28, 0, %s27
      %s30 = sadd.s32 1, %s21
      %s31 = scalar_select %p28, %s30, %s21
      %p32 = scmp.ge.s32.totalorder %s31, 2
      %s33 = scalar_select %p32, 0, %s31
      %s34 = ssub.s32 %s21, %s33
      %p35 = scmp.eq.s32.totalorder %s34, 0
      %s37 = sadd.s32 %s36, 1
      %s38 = scalar_select %p35, %s36, %s37
      %p41 = pneg %p35
      %p42 = scmp.eq.s32.totalorder %s14, 1
      %p43 = por %p41, %p42
      %p44 = scmp.ne.s32.totalorder %s36, %s39
      %p45 = scmp.eq.s32.totalorder %s14, 0
      %p46 = por %p44, %p45
      %p47 = scmp.ne.s32.totalorder %s36, %s39
      %p48 = scmp.eq.s32.totalorder %s19, 1
      %p49 = por %p47, %p48
      %p50 = scmp.ne.s32.totalorder %s39, %s40
      %p51 = scmp.eq.s32.totalorder %s19, 0
      %p52 = por %p50, %p51
      %p53 = scmp.ne.s32.totalorder %s39, %s40
      %p54 = scmp.eq.s32.totalorder %s20, 1
      %p55 = por %p53, %p54
      %p57 = scmp.ne.s32.totalorder %s40, %s56
      %p58 = scmp.eq.s32.totalorder %s20, 0
      %p59 = por %p57, %p58
      %s60 = ssub.s32 %s22, %s29
      %p61 = scmp.eq.s32.totalorder %s60, 0
      %s63 = sadd.s32 %s62, 1
      %s64 = scalar_select %p61, %s62, %s63
      %p67 = pneg %p61
      %p68 = scmp.eq.s32.totalorder %s14, 1
      %p69 = por %p67, %p68
      %p70 = scmp.ne.s32.totalorder %s62, %s65
      %p71 = scmp.eq.s32.totalorder %s14, 0
      %p72 = por %p70, %p71
      %p73 = scmp.ne.s32.totalorder %s62, %s65
      %p74 = scmp.eq.s32.totalorder %s19, 1
      %p75 = por %p73, %p74
      %p76 = scmp.ne.s32.totalorder %s65, %s66
      %p77 = scmp.eq.s32.totalorder %s19, 0
      %p78 = por %p76, %p77
      %p79 = scmp.ne.s32.totalorder %s65, %s66
      %p80 = scmp.eq.s32.totalorder %s20, 1
      %p81 = por %p79, %p80
      %p83 = scmp.ne.s32.totalorder %s66, %s82
      %p84 = scmp.eq.s32.totalorder %s20, 0
      %p85 = por %p83, %p84
      %s86 = ssub.s32 %s22, %s29
      %p87 = scmp.eq.s32.totalorder %s86, 0
      %s89 = sadd.s32 %s88, 1
      %s90 = scalar_select %p87, %s88, %s89
      %p93 = pneg %p87
      %p94 = scmp.eq.s32.totalorder %s14, 1
      %p95 = por %p93, %p94
      %p96 = scmp.ne.s32.totalorder %s88, %s91
      %p97 = scmp.eq.s32.totalorder %s14, 0
      %p98 = por %p96, %p97
      %p99 = scmp.ne.s32.totalorder %s88, %s91
      %p100 = scmp.eq.s32.totalorder %s19, 1
      %p101 = por %p99, %p100
      %p102 = scmp.ne.s32.totalorder %s91, %s92
      %p103 = scmp.eq.s32.totalorder %s19, 0
      %p104 = por %p102, %p103
      %p105 = scmp.ne.s32.totalorder %s91, %s92
      %p106 = scmp.eq.s32.totalorder %s20, 1
      %p107 = por %p105, %p106
      %p109 = scmp.ne.s32.totalorder %s92, %s108
      %p110 = scmp.eq.s32.totalorder %s20, 0
      %p111 = por %p109, %p110
      %s112 = ssub.s32 %s22, %s29
      %p113 = scmp.eq.s32.totalorder %s112, 0
      %s115 = sadd.s32 %s114, 1
      %s116 = scalar_select %p113, %s114, %s115
      %p119 = pneg %p113
      %p120 = scmp.eq.s32.totalorder %s14, 1
      %p121 = por %p119, %p120
      %p122 = scmp.ne.s32.totalorder %s114, %s117
      %p123 = scmp.eq.s32.totalorder %s14, 0
      %p124 = por %p122, %p123
      %p125 = scmp.ne.s32.totalorder %s114, %s117
      %p126 = scmp.eq.s32.totalorder %s19, 1
      %p127 = por %p125, %p126
      %p128 = scmp.ne.s32.totalorder %s117, %s118
      %p129 = scmp.eq.s32.totalorder %s19, 0
      %p130 = por %p128, %p129
      %p131 = scmp.ne.s32.totalorder %s117, %s118
      %p132 = scmp.eq.s32.totalorder %s20, 1
      %p133 = por %p131, %p132
      %p135 = scmp.ne.s32.totalorder %s118, %s134
      %p136 = scmp.eq.s32.totalorder %s20, 0
      %p137 = por %p135, %p136
      %s139 = sadd.s32 %s138, 1
      %p142 = scmp.eq.s32.totalorder %s14, 1
      %p143 = scmp.ne.s32.totalorder %s138, %s140
      %p144 = scmp.eq.s32.totalorder %s14, 0
      %p145 = por %p143, %p144
      %p146 = scmp.ne.s32.totalorder %s138, %s140
      %p147 = scmp.eq.s32.totalorder %s19, 1
      %p148 = por %p146, %p147
      %p149 = scmp.ne.s32.totalorder %s140, %s141
      %p150 = scmp.eq.s32.totalorder %s19, 0
      %p151 = por %p149, %p150
      %p152 = scmp.ne.s32.totalorder %s140, %s141
      %p153 = scmp.eq.s32.totalorder %s20, 1
      %p154 = por %p152, %p153
      %p156 = scmp.ne.s32.totalorder %s141, %s155
      %p157 = scmp.eq.s32.totalorder %s20, 0
      %p158 = por %p156, %p157
      %s159 = ssub.s32 %s21, %s33
      %p160 = scmp.eq.s32.totalorder %s159, 0
      %s162 = sadd.s32 %s161, 1
      %s163 = scalar_select %p160, %s161, %s162
      %p166 = pneg %p160
      %p167 = scmp.eq.s32.totalorder %s14, 1
      %p168 = por %p166, %p167
      %p169 = scmp.ne.s32.totalorder %s161, %s164
      %p170 = scmp.eq.s32.totalorder %s14, 0
      %p171 = por %p169, %p170
      %p172 = scmp.ne.s32.totalorder %s161, %s164
      %p173 = scmp.eq.s32.totalorder %s19, 1
      %p174 = por %p172, %p173
      %p175 = scmp.ne.s32.totalorder %s164, %s165
      %p176 = scmp.eq.s32.totalorder %s19, 0
      %p177 = por %p175, %p176
      %p178 = scmp.ne.s32.totalorder %s164, %s165
      %p179 = scmp.eq.s32.totalorder %s20, 1
      %p180 = por %p178, %p179
      %p182 = scmp.ne.s32.totalorder %s165, %s181
      %p183 = scmp.eq.s32.totalorder %s20, 0
      %p184 = por %p182, %p183
      %p185 = scmp.le.s32.totalorder 1, %s14
      %p186 = scmp.lt.s32.totalorder %s14, 3
      %p187 = pnand %p185, %p186
      %p188 = pneg %p187
      // Predicated region
      $region9: #{position_wise_feed_forward.1} parent=5 // pred_check
        _
      $region10: #{position_wise_feed_forward.1} parent=5 // pred_check_branch
        %190 = sbr.rel (%p187) target = $region12
      $region11: #{position_wise_feed_forward.1} parent=5 // pred_region
        %s191 = ssub.s32 %s14, 1
        // Predicated region
        $region13: #{position_wise_feed_forward.1} parent=11 // pred_check
          %p192 = pneg %p78
        $region14: #{position_wise_feed_forward.1} parent=11 // pred_check_branch
          %194 = sbr.rel (%p192) target = $region16
        $region15: #{position_wise_feed_forward.1} parent=11 // pred_region
          %p195 = scmp.lt.s32.totalorder %s24, 0
          %s196 = scalar_select %p195, %s24, 0
          %s197 = smul.addr %s196, 8
          %s198 = scalar_lea.vmem %s1, %s197
        $region16: #{position_wise_feed_forward.1} parent=11 // pred_fallthru
          _
        // Predicated region
        $region17: #{position_wise_feed_forward.1} parent=11 // pred_check
          %p199 = pneg %p104
        $region18: #{position_wise_feed_forward.1} parent=11 // pred_check_branch
          %201 = sbr.rel (%p199) target = $region20
        $region19: #{position_wise_feed_forward.1} parent=11 // pred_region
          %p202 = scmp.lt.s32.totalorder %s24, 0
          %s203 = scalar_select %p202, %s24, 0
          %s204 = scalar_lea.vmem %s2, %s203
        $region20: #{position_wise_feed_forward.1} parent=11 // pred_fallthru
          _
        // Predicated region
        $region21: #{position_wise_feed_forward.1} parent=11 // pred_check
          %p205 = pneg %p130
        $region22: #{position_wise_feed_forward.1} parent=11 // pred_check_branch
          %207 = sbr.rel (%p205) target = $region24
        $region23: #{position_wise_feed_forward.1} parent=11 // pred_region
          %s208 = smul.u32 8, %s24
          %p209 = scmp.lt.s32.totalorder %s208, 7
          %s210 = scalar_select %p209, %s208, 7
          %s211 = smul.addr %s210, 8
          %s212 = scalar_lea.vmem %s3, %s211
          %s213 = smul.u32 8, %s24
        $region24: #{position_wise_feed_forward.1} parent=11 // pred_fallthru
          _
        // Predicated region
        $region25: #{position_wise_feed_forward.1} parent=11 // pred_check
          %p214 = pneg %p151
        $region26: #{position_wise_feed_forward.1} parent=11 // pred_check_branch
          %216 = sbr.rel (%p214) target = $region28
        $region27: #{position_wise_feed_forward.1} parent=11 // pred_region
          _
        $region28: #{position_wise_feed_forward.1} parent=11 // pred_fallthru
          _
      $region12: #{position_wise_feed_forward.1} parent=5 // pred_fallthru
        _
      %p217 = scmp.lt.s32.totalorder %s14, 2
      // Predicated region
      $region29: #{position_wise_feed_forward.1} parent=5 // pred_check
        %p218 = pneg %p217
      $region30: #{position_wise_feed_forward.1} parent=5 // pred_check_branch
        %220 = sbr.rel (%p218) target = $region32
      $region31: #{position_wise_feed_forward.1} parent=5 // pred_region
        // Predicated region
        $region33: #{position_wise_feed_forward.1} parent=31 // pred_check
          %p221 = pneg %p46
        $region34: #{position_wise_feed_forward.1} parent=31 // pred_check_branch
          %223 = sbr.rel (%p221) target = $region36
        $region35: #{position_wise_feed_forward.1} parent=31 // pred_region
          %p224 = scmp.lt.s32.totalorder %s21, 1
          %s225 = scalar_select %p224, %s21, 1
          %s226 = smul.addr %s225, 8
          %s227 = scalar_lea.vmem %s0, %s226
        $region36: #{position_wise_feed_forward.1} parent=31 // pred_fallthru
          _
      $region32: #{position_wise_feed_forward.1} parent=5 // pred_fallthru
        _
      %p228 = scmp.le.s32.totalorder 1, %s14
      %p229 = scmp.lt.s32.totalorder %s14, 3
      %p230 = pnand %p228, %p229
      %p231 = pneg %p230
      // Predicated region
      $region37: #{position_wise_feed_forward.1} parent=5 // pred_check
        _
      $region38: #{position_wise_feed_forward.1} parent=5 // pred_check_branch
        %233 = sbr.rel (%p230) target = $region40
      $region39: #{position_wise_feed_forward.1} parent=5 // pred_region
        %s234 = ssub.s32 %s14, 1
        %p235 = scmp.lt.s32.totalorder %s23, 1
        %s236 = scalar_select %p235, %s23, 1
        %s237 = smul.addr %s236, 8
        %s238 = scalar_lea.vmem %s0, %s237
        %p239 = pneg %p52
        %p240 = pneg %p49
        %p241 = scmp.lt.s32.totalorder %s24, 0
        %s242 = scalar_select %p241, %s24, 0
        %s243 = smul.addr %s242, 8
        %s244 = scalar_lea.vmem %s1, %s243
        %p245 = pneg %p78
        %p246 = pneg %p75
        %p247 = scmp.lt.s32.totalorder %s24, 0
        %s248 = scalar_select %p247, %s24, 0
        %s249 = scalar_lea.vmem %s2, %s248
        %p250 = pneg %p104
        %p251 = pneg %p101
        %s252 = smul.u32 8, %s24
        %p253 = scmp.lt.s32.totalorder %s252, 7
        %s254 = scalar_select %p253, %s252, 7
        %s255 = smul.addr %s254, 8
        %s256 = scalar_lea.vmem %s3, %s255
        %p257 = pneg %p130
        %p258 = pneg %p127
        %p259 = pneg %p151
        %p260 = pneg %p148
        %p261 = pneg %p177
        %p262 = pneg %p174
        %s263 = sand.u32 %s164, 1
        %s264 = scalar_lea.sflag [#allocation3], %s263
        %s265 = sand.u32 %s164, 1
        %s266 = smul.addr %s265, 8
        %s267 = scalar_lea.vmem [#allocation2], %s266
        %p268 = scmp.lt.s32.totalorder %s23, 1
        %s269 = scalar_select %p268, %s23, 1
        %s270 = smul.addr %s269, 8
        %s271 = scalar_lea.vmem %s0, %s270
        %p272 = scmp.lt.s32.totalorder %s24, 0
        %s273 = scalar_select %p272, %s24, 0
        %s274 = smul.addr %s273, 8
        %s275 = scalar_lea.vmem %s1, %s274
        %p276 = scmp.lt.s32.totalorder %s24, 0
        %s277 = scalar_select %p276, %s24, 0
        %s278 = scalar_lea.vmem %s2, %s277
        %s279 = smul.u32 8, %s24
        %p280 = scmp.lt.s32.totalorder %s279, 7
        %s281 = scalar_select %p280, %s279, 7
        %s282 = smul.addr %s281, 8
        %s283 = scalar_lea.vmem %s3, %s282
        %s284 = smul.u32 8, %s24
        %v285 = vld [vmem:[%s271] sm:$0xff]
        %v286 = vld [vmem:[%s275] sm:$0xff]
        %v287 = vld [vmem:[%s275 + $0x8] sm:$0xff]
        %v288 = vld [vmem:[%s275 + $0x10] sm:$0xff]
        %v289 = vld [vmem:[%s275 + $0x18] sm:$0xff]
        %v290 = vld [vmem:[%s278] sm:$0x1]
        %v292 = vlaneseq
        %v293 = vshrl.u32 %v292, 7
        %v294 = vsub.s32 0, %v293
        %v295 = vrot.slane %v290, %v294
        %vm297 = vcmask 261120
        %v299 = vsel %vm297, %v285, 0
        %301 = vmatprep.subr.mxu0 0.0
        %302 = vmatpush1.msra.mxu0 0.0
        %303 = vmatprep.subr.mxu0 0.0
        %304 = vmatpush1.msra.mxu0 0.0
        %305 = vmatprep.subr.mxu0 0.0
        %306 = vmatpush1.msra.mxu0 0.0
        %307 = vmatprep.subr.mxu0 0.0
        %308 = vmatpush1.msra.mxu0 0.0
        %309 = vmatprep.subr.mxu0 0.0
        %310 = vmatpush1.msra.mxu0 0.0
        %311 = vmatprep.subr.mxu0 0.0
        %312 = vmatpush1.msra.mxu0 0.0
        %313 = vmatprep.subr.mxu0 0.0
        %314 = vmatpush1.msra.mxu0 0.0
        %315 = vmatprep.subr.mxu0 0.0
        %316 = vmatpush1.msra.mxu0 0.0
        %317 = vmatprep.subr.mxu0 0.0
        %318 = vmatpush1.msra.mxu0 0.0
        %319 = vmatprep.subr.mxu0 0.0
        %320 = vmatpush1.msra.mxu0 0.0
        %321 = vmatprep.subr.mxu0 0.0
        %322 = vmatpush1.msra.mxu0 0.0
        %323 = vmatprep.subr.mxu0 0.0
        %324 = vmatpush1.msra.mxu0 0.0
        %325 = vmatprep.subr.mxu0 0.0
        %326 = vmatpush1.msra.mxu0 %v289
        %327 = vmatprep.subr.mxu0 0.0
        %328 = vmatpush1.msra.mxu0 %v288
        %329 = vmatprep.subr.mxu0 0.0
        %330 = vmatpush1.msra.mxu0 %v287
        %331 = vmatprep.subr.mxu0 0.0
        %332 = vmatpush1.msra.mxu0 %v286
        %333 = vmatprep.subr.mxu0 0.0
        %334 = vmatpush2.msra.mxu0 0.0
        %335 = vmatprep.subr.mxu0 0.0
        %336 = vmatpush2.msra.mxu0 0.0
        %337 = vmatprep.subr.mxu0 0.0
        %338 = vmatpush2.msra.mxu0 0.0
        %339 = vmatprep.subr.mxu0 0.0
        %340 = vmatpush2.msra.mxu0 0.0
        %341 = vmatprep.subr.mxu0 0.0
        %342 = vmatpush2.msra.mxu0 0.0
        %343 = vmatprep.subr.mxu0 0.0
        %344 = vmatpush2.msra.mxu0 0.0
        %345 = vmatprep.subr.mxu0 0.0
        %346 = vmatpush2.msra.mxu0 0.0
        %347 = vmatprep.subr.mxu0 0.0
        %348 = vmatpush2.msra.mxu0 0.0
        %349 = vmatprep.subr.mxu0 0.0
        %350 = vmatpush2.msra.mxu0 0.0
        %351 = vmatprep.subr.mxu0 0.0
        %352 = vmatpush2.msra.mxu0 0.0
        %353 = vmatprep.subr.mxu0 0.0
        %354 = vmatpush2.msra.mxu0 0.0
        %355 = vmatprep.subr.mxu0 0.0
        %356 = vmatpush2.msra.mxu0 0.0
        %357 = vmatprep.subr.mxu0 0.0
        %358 = vmatpush2.msra.mxu0 0.0
        %359 = vmatprep.subr.mxu0 0.0
        %360 = vmatpush2.msra.mxu0 0.0
        %361 = vmatprep.subr.mxu0 0.0
        %362 = vmatpush2.msra.mxu0 0.0
        %363 = vmatprep.subr.mxu0 0.0
        %364 = vmatpush2.msra.mxu0 0.0
        %365 = vmatprep.mubr.f32.mxu0 0.0
        %366 = vmatmul.mubr.f32.gmra.mxu0 %v299
        %v367 = vpop.f32.mrf.mxu0
        %v368 = vadd.f32 %v295, %v367
        %v369 = vpop.f32.mrf.mxu0
        %370 = vdwg.mxu0
        %v371 = vmax.f32 %v368, 0.0
        %v372 = vld [vmem:[%s283] sm:$0xff]
        %v373 = vld [vmem:[%s283 + $0x8] sm:$0xff]
        %v374 = vld [vmem:[%s283 + $0x10] sm:$0xff]
        %v375 = vld [vmem:[%s283 + $0x18] sm:$0xff]
        %v376 = vld [vmem:[%s283 + $0x20] sm:$0xff]
        %v377 = vld [vmem:[%s283 + $0x28] sm:$0xff]
        %v378 = vld [vmem:[%s283 + $0x30] sm:$0xff]
        %v379 = vld [vmem:[%s283 + $0x38] sm:$0xff]
        %vm380 = vcmask 523264
        %v382 = vsel %vm380, %v371, 0
        %384 = vmatprep.subr.mxu0 0.0
        %385 = vmatpush1.msra.mxu0 0.0
        %386 = vmatprep.subr.mxu0 0.0
        %387 = vmatpush1.msra.mxu0 0.0
        %388 = vmatprep.subr.mxu0 0.0
        %389 = vmatpush1.msra.mxu0 0.0
        %390 = vmatprep.subr.mxu0 0.0
        %391 = vmatpush1.msra.mxu0 0.0
        %392 = vmatprep.subr.mxu0 0.0
        %393 = vmatpush1.msra.mxu0 0.0
        %394 = vmatprep.subr.mxu0 0.0
        %395 = vmatpush1.msra.mxu0 0.0
        %396 = vmatprep.subr.mxu0 0.0
        %397 = vmatpush1.msra.mxu0 0.0
        %398 = vmatprep.subr.mxu0 0.0
        %399 = vmatpush1.msra.mxu0 0.0
        %400 = vmatprep.subr.mxu0 0.0
        %401 = vmatpush1.msra.mxu0 %v379
        %402 = vmatprep.subr.mxu0 0.0
        %403 = vmatpush1.msra.mxu0 %v378
        %404 = vmatprep.subr.mxu0 0.0
        %405 = vmatpush1.msra.mxu0 %v377
        %406 = vmatprep.subr.mxu0 0.0
        %407 = vmatpush1.msra.mxu0 %v376
        %408 = vmatprep.subr.mxu0 0.0
        %409 = vmatpush1.msra.mxu0 %v375
        %410 = vmatprep.subr.mxu0 0.0
        %411 = vmatpush1.msra.mxu0 %v374
        %412 = vmatprep.subr.mxu0 0.0
        %413 = vmatpush1.msra.mxu0 %v373
        %414 = vmatprep.subr.mxu0 0.0
        %415 = vmatpush1.msra.mxu0 %v372
        %416 = vmatprep.subr.mxu0 0.0
        %417 = vmatpush2.msra.mxu0 0.0
        %418 = vmatprep.subr.mxu0 0.0
        %419 = vmatpush2.msra.mxu0 0.0
        %420 = vmatprep.subr.mxu0 0.0
        %421 = vmatpush2.msra.mxu0 0.0
        %422 = vmatprep.subr.mxu0 0.0
        %423 = vmatpush2.msra.mxu0 0.0
        %424 = vmatprep.subr.mxu0 0.0
        %425 = vmatpush2.msra.mxu0 0.0
        %426 = vmatprep.subr.mxu0 0.0
        %427 = vmatpush2.msra.mxu0 0.0
        %428 = vmatprep.subr.mxu0 0.0
        %429 = vmatpush2.msra.mxu0 0.0
        %430 = vmatprep.subr.mxu0 0.0
        %431 = vmatpush2.msra.mxu0 0.0
        %432 = vmatprep.subr.mxu0 0.0
        %433 = vmatpush2.msra.mxu0 0.0
        %434 = vmatprep.subr.mxu0 0.0
        %435 = vmatpush2.msra.mxu0 0.0
        %436 = vmatprep.subr.mxu0 0.0
        %437 = vmatpush2.msra.mxu0 0.0
        %438 = vmatprep.subr.mxu0 0.0
        %439 = vmatpush2.msra.mxu0 0.0
        %440 = vmatprep.subr.mxu0 0.0
        %441 = vmatpush2.msra.mxu0 0.0
        %442 = vmatprep.subr.mxu0 0.0
        %443 = vmatpush2.msra.mxu0 0.0
        %444 = vmatprep.subr.mxu0 0.0
        %445 = vmatpush2.msra.mxu0 0.0
        %446 = vmatprep.subr.mxu0 0.0
        %447 = vmatpush2.msra.mxu0 0.0
        %448 = vmatprep.mubr.f32.mxu0 0.0
        %449 = vmatmul.mubr.f32.gmra.mxu0 %v382
        %v450 = vpop.f32.mrf.mxu0
        %v451 = vadd.f32 0.0, %v450
        %v452 = vpop.f32.mrf.mxu0
        %453 = vdwg.mxu0
        %p454 = scmp.eq.s32.totalorder %s24, 0
        // Predicated region
        $region41: #{position_wise_feed_forward.1} parent=39 // pred_check
          %p455 = pneg %p454
        $region42: #{position_wise_feed_forward.1} parent=39 // pred_check_branch
          %457 = sbr.rel (%p455) target = $region44
        $region43: #{position_wise_feed_forward.1} parent=39 // pred_region
          %v458 = vld [vmem:[%s4] sm:$0x1]
          %v460 = vlaneseq
          %v461 = vshrl.u32 %v460, 7
          %v462 = vsub.s32 0, %v461
          %v463 = vrot.slane %v458, %v462
          %v465 = vadd.f32 %v451, %v463
          %466 = vst.msk [vmem:[%s267] sm:$0xff] %vm297, %v465
        $region44: #{position_wise_feed_forward.1} parent=39 // pred_fallthru
          _
        %p467 = scmp.gt.s32.totalorder %s24, 0
        // Predicated region
        $region45: #{position_wise_feed_forward.1} parent=39 // pred_check
          %p468 = pneg %p467
        $region46: #{position_wise_feed_forward.1} parent=39 // pred_check_branch
          %470 = sbr.rel (%p468) target = $region48
        $region47: #{position_wise_feed_forward.1} parent=39 // pred_region
          %v471 = vld [vmem:[%s267] sm:$0xff]
          %v472 = vadd.f32 %v471, %v451
          %473 = vst.msk [vmem:[%s267] sm:$0xff] %vm297, %v472
        $region48: #{position_wise_feed_forward.1} parent=39 // pred_fallthru
          _
        %s474 = sand.u32 %s164, 1
        %s475 = scalar_lea.sflag [#allocation3], %s474
        %s476 = sand.u32 %s164, 1
        %s477 = smul.addr %s476, 8
        %s478 = scalar_lea.vmem [#allocation2], %s477
        // Predicated region
        $region49: #{position_wise_feed_forward.1} parent=39 // pred_check
          %p479 = pneg %p174
        $region50: #{position_wise_feed_forward.1} parent=39 // pred_check_branch
          %481 = sbr.rel (%p479) target = $region52
        $region51: #{position_wise_feed_forward.1} parent=39 // pred_region
          %s483 = ssub.s32 128, 128
          %484 = vsyncadd %s475, %s483
          %s485 = smul.addr %s23, 128
          %s486 = scalar_lea.hbm %s5, %s485
          %s488 = sshll.u32 %s478, 4
          %s489 = int_to_ptr.vmem [resolvable:$true] %s488
          %491 = dma.vmem_to_hbm [thread:$0]  %s489, 128, %s486, %s475
        $region52: #{position_wise_feed_forward.1} parent=39 // pred_fallthru
          _
      $region40: #{position_wise_feed_forward.1} parent=5 // pred_fallthru
        _
      %p492 = scmp.le.s32.totalorder 2, %s14
      // Predicated region
      $region53: #{position_wise_feed_forward.1} parent=5 // pred_check
        %p493 = pneg %p492
      $region54: #{position_wise_feed_forward.1} parent=5 // pred_check_branch
        %495 = sbr.rel (%p493) target = $region56
      $region55: #{position_wise_feed_forward.1} parent=5 // pred_region
        %s496 = ssub.s32 %s14, 2
        // Predicated region
        $region57: #{position_wise_feed_forward.1} parent=55 // pred_check
          %p497 = pneg %p180
        $region58: #{position_wise_feed_forward.1} parent=55 // pred_check_branch
          %499 = sbr.rel (%p497) target = $region60
        $region59: #{position_wise_feed_forward.1} parent=55 // pred_region
          %s500 = sand.u32 %s165, 1
          %s501 = scalar_lea.sflag [#allocation3], %s500
          %s502 = sand.u32 %s165, 1
          %s503 = smul.addr %s502, 8
          %s504 = scalar_lea.vmem [#allocation2], %s503
          %505 = dma.done %s501, 128
        $region60: #{position_wise_feed_forward.1} parent=55 // pred_fallthru
          _
      $region56: #{position_wise_feed_forward.1} parent=5 // pred_fallthru
        _
    $region6: #{position_wise_feed_forward.1} parent=1 // loop_footer
      %s18 = sadd.s32 1, %s14
    $region7: #{position_wise_feed_forward.1} parent=1 // loop_footer_branch
      %13 = sbr.rel target = $region3
    $region8: #{position_wise_feed_forward.1} parent=1 // loop_exit
      _
    %506 = vsyncpa [#allocation3], 1
    %s507 = scalar_lea.sflag [#allocation3], 1
    %508 = vsyncpa %s507, 1

</llo_original>
